<compile_context>
chip_gen: v7x
topology: tpu7x:2x2x1
jax: 0.10.0
libtpu: 0.0.40
codegen_flags: <defaults>
</compile_context>

<pallas_src>
import jax
import jax.numpy as jnp
from jax.experimental import pallas as pl
from jax.experimental.pallas import tpu as pltpu
import numpy as np


def _round_up(n, m):
    return ((n + m - 1) // m) * m


def mlp_kernel(x_ref, w1_ref, b1_ref, w2_ref, b2_ref, w3_ref, b3_ref, o_ref):
    """One batch tile: y = ((x W1 + b1) W2 + b2) W3 + b3 (weights are (in, out))."""
    x = x_ref[...]                                            # (TB, D_in)
    h = jnp.dot(x, w1_ref[...],
                preferred_element_type=jnp.float32) + b1_ref[...]
    h = jnp.dot(h, w2_ref[...],
                preferred_element_type=jnp.float32) + b2_ref[...]
    y = jnp.dot(h, w3_ref[...],
                preferred_element_type=jnp.float32) + b3_ref[...]
    o_ref[...] = y.astype(o_ref.dtype)


def mlp_b(x, params, *, tb=None):
    """x: (N, ...) -> flattened to (N, D_in). params: (w1, b1, w2, b2, w3, b3)
    with weights in (in_features, out_features) layout and biases (1, out)."""
    N = x.shape[0]
    xf = x.reshape(N, -1)
    d_in = xf.shape[1]
    w1, b1, w2, b2, w3, b3 = params
    dim = w1.shape[1]
    d_out = w3.shape[1]

    # Batch tile: sublane-aligned; large batches get multiple parallel steps.
    if tb is None:
        tb = 128 if N >= 128 else _round_up(N, 8)
    n_pad = _round_up(N, tb)
    if n_pad != N:
        xf = jnp.pad(xf, ((0, n_pad - N), (0, 0)))

    # Constant index_map: parameter blocks are fetched once and stay in VMEM.
    def const(shape):
        return pl.BlockSpec(shape, lambda i: (0,) * len(shape))

    out = pl.pallas_call(
        mlp_kernel,
        out_shape=jax.ShapeDtypeStruct((n_pad, d_out), x.dtype),
        grid=(n_pad // tb,),
        in_specs=[
            pl.BlockSpec((tb, d_in), lambda i: (i, 0)),   # x tile
            const((d_in, dim)),                           # W1 (in, out)
            const((1, dim)),                              # b1
            const((dim, dim)),                            # W2
            const((1, dim)),                              # b2
            const((dim, d_out)),                          # W3
            const((1, d_out)),                            # b3
        ],
        out_specs=pl.BlockSpec((tb, d_out), lambda i: (i, 0)),
        compiler_params=pltpu.CompilerParams(
            dimension_semantics=("parallel",)),
    )(xf, w1, b1, w2, b2, w3, b3)

    return out[:N]


# ------------------------- pure-JAX reference ------------------------------

def reference(x, torch_params):
    """PyTorch-layout weights: (out_features, in_features)."""
    w1, b1, w2, b2, w3, b3 = torch_params
    xf = x.reshape(x.shape[0], -1)
    h = xf @ w1.T + b1
    h = h @ w2.T + b2
    return h @ w3.T + b3


# ----------------------------------------------------------------------------

if __name__ == "__main__":
    # x.view(N, -1) implies input_dim = C*H*W; defaults dim=256, n_blk=3.
    N, C, H, W = 2, 4, 16, 16
    D_IN, DIM, D_OUT = C * H * W, 256, 128

    key = jax.random.PRNGKey(0)
    ks = jax.random.split(key, 7)

    # PyTorch-layout parameters (Linear weight: (out_features, in_features)).
    w1_t = 0.05 * jax.random.normal(ks[0], (DIM, D_IN), jnp.float32)
    b1 = 0.1 * jax.random.normal(ks[1], (DIM,), jnp.float32)
    w2_t = 0.05 * jax.random.normal(ks[2], (DIM, DIM), jnp.float32)
    b2 = 0.1 * jax.random.normal(ks[3], (DIM,), jnp.float32)
    w3_t = 0.05 * jax.random.normal(ks[4], (D_OUT, DIM), jnp.float32)
    b3 = 0.1 * jax.random.normal(ks[5], (D_OUT,), jnp.float32)
    x = jax.random.normal(ks[6], (N, C, H, W), jnp.float32)

    # Kernel-layout parameters: weights transposed to (in, out), biases (1, out).
    kparams = (
        w1_t.T, b1.reshape(1, DIM),
        w2_t.T, b2.reshape(1, DIM),
        w3_t.T, b3.reshape(1, D_OUT),
    )

    out = jax.block_until_ready(mlp_b(x, kparams))

    ref = reference(x, (w1_t, b1, w2_t, b2, w3_t, b3))
    np.testing.assert_allclose(np.asarray(out), np.asarray(ref),
                               rtol=1e-4, atol=5e-4)

    print("KERNEL_OK")
</pallas_src>

<mosaic_0001>
module attributes {stable_mosaic.version = 11 : i64} {
  func.func @mlp_kernel(%arg0: i32, %arg1: memref<8x1024xf32, #tpu.memory_space<vmem>>, %arg2: memref<1024x256xf32, #tpu.memory_space<vmem>>, %arg3: memref<1x256xf32, #tpu.memory_space<vmem>>, %arg4: memref<256x256xf32, #tpu.memory_space<vmem>>, %arg5: memref<1x256xf32, #tpu.memory_space<vmem>>, %arg6: memref<256x128xf32, #tpu.memory_space<vmem>>, %arg7: memref<1x128xf32, #tpu.memory_space<vmem>>, %arg8: memref<8x128xf32, #tpu.memory_space<vmem>>) attributes {dimension_semantics = [#tpu.dimension_semantics<parallel>], iteration_bounds = array<i64: 1>, scalar_prefetch = 0 : i64, scratch_operands = 0 : i64, tpu.core_type = #tpu.core_type<tc>, window_params = [{transform_indices = @transform_0, window_bounds = array<i64: 8, 1024>}, {pipeline_mode = #tpu.pipeline_mode<synchronous>, transform_indices = @transform_1, window_bounds = array<i64: 1024, 256>}, {pipeline_mode = #tpu.pipeline_mode<synchronous>, transform_indices = @transform_2, window_bounds = array<i64: 1, 256>}, {pipeline_mode = #tpu.pipeline_mode<synchronous>, transform_indices = @transform_3, window_bounds = array<i64: 256, 256>}, {pipeline_mode = #tpu.pipeline_mode<synchronous>, transform_indices = @transform_4, window_bounds = array<i64: 1, 256>}, {pipeline_mode = #tpu.pipeline_mode<synchronous>, transform_indices = @transform_5, window_bounds = array<i64: 256, 128>}, {pipeline_mode = #tpu.pipeline_mode<synchronous>, transform_indices = @transform_6, window_bounds = array<i64: 1, 128>}, {transform_indices = @transform_7, window_bounds = array<i64: 8, 128>}]} {
    %c0 = arith.constant 0 : index
    %c0_0 = arith.constant 0 : index
    %0 = vector.load %arg1[%c0, %c0_0] : memref<8x1024xf32, #tpu.memory_space<vmem>>, vector<8x1024xf32>
    %c0_1 = arith.constant 0 : index
    %c0_2 = arith.constant 0 : index
    %1 = vector.load %arg2[%c0_1, %c0_2] : memref<1024x256xf32, #tpu.memory_space<vmem>>, vector<1024x256xf32>
    %cst = arith.constant dense<0.000000e+00> : vector<8x256xf32>
    %2 = tpu.matmul %0, %1, %cst {dimension_numbers = #tpu.dot_dimension_numbers<[1], [0], [0], [1], [0, 0, 1, 1], [], []>} : vector<8x1024xf32>, vector<1024x256xf32>, vector<8x256xf32> -> vector<8x256xf32>
    %c0_3 = arith.constant 0 : index
    %c0_4 = arith.constant 0 : index
    %3 = vector.load %arg3[%c0_3, %c0_4] : memref<1x256xf32, #tpu.memory_space<vmem>>, vector<1x256xf32>
    %4 = vector.broadcast %3 : vector<1x256xf32> to vector<8x256xf32>
    %5 = arith.addf %2, %4 : vector<8x256xf32>
    %c0_5 = arith.constant 0 : index
    %c0_6 = arith.constant 0 : index
    %6 = vector.load %arg4[%c0_5, %c0_6] : memref<256x256xf32, #tpu.memory_space<vmem>>, vector<256x256xf32>
    %cst_7 = arith.constant dense<0.000000e+00> : vector<8x256xf32>
    %7 = tpu.matmul %5, %6, %cst_7 {dimension_numbers = #tpu.dot_dimension_numbers<[1], [0], [0], [1], [0, 0, 1, 1], [], []>} : vector<8x256xf32>, vector<256x256xf32>, vector<8x256xf32> -> vector<8x256xf32>
    %c0_8 = arith.constant 0 : index
    %c0_9 = arith.constant 0 : index
    %8 = vector.load %arg5[%c0_8, %c0_9] : memref<1x256xf32, #tpu.memory_space<vmem>>, vector<1x256xf32>
    %9 = vector.broadcast %8 : vector<1x256xf32> to vector<8x256xf32>
    %10 = arith.addf %7, %9 : vector<8x256xf32>
    %c0_10 = arith.constant 0 : index
    %c0_11 = arith.constant 0 : index
    %11 = vector.load %arg6[%c0_10, %c0_11] : memref<256x128xf32, #tpu.memory_space<vmem>>, vector<256x128xf32>
    %cst_12 = arith.constant dense<0.000000e+00> : vector<8x128xf32>
    %12 = tpu.matmul %10, %11, %cst_12 {dimension_numbers = #tpu.dot_dimension_numbers<[1], [0], [0], [1], [0, 0, 1, 1], [], []>} : vector<8x256xf32>, vector<256x128xf32>, vector<8x128xf32> -> vector<8x128xf32>
    %c0_13 = arith.constant 0 : index
    %c0_14 = arith.constant 0 : index
    %13 = vector.load %arg7[%c0_13, %c0_14] : memref<1x128xf32, #tpu.memory_space<vmem>>, vector<1x128xf32>
    %14 = vector.broadcast %13 : vector<1x128xf32> to vector<8x128xf32>
    %15 = arith.addf %12, %14 : vector<8x128xf32>
    %c0_15 = arith.constant 0 : index
    %c0_16 = arith.constant 0 : index
    %16 = vector.load %arg8[%c0_15, %c0_16] : memref<8x128xf32, #tpu.memory_space<vmem>>, vector<8x128xf32>
    tpu.vector_store %arg8[%c0_15, %c0_16], %15 {strides = array<i32>} : memref<8x128xf32, #tpu.memory_space<vmem>>, vector<8x128xf32>,
    return
  }
  func.func @transform_0(%arg0: i32) -> (i32, i32) {
    %c0_i32 = arith.constant 0 : i32
    %c0_i32_0 = arith.constant 0 : i32
    return %arg0, %c0_i32 : i32, i32
  }
  func.func @transform_1(%arg0: i32) -> (i32, i32) {
    %c0_i32 = arith.constant 0 : i32
    %c0_i32_0 = arith.constant 0 : i32
    %c0_i32_1 = arith.constant 0 : i32
    return %c0_i32, %c0_i32_0 : i32, i32
  }
  func.func @transform_2(%arg0: i32) -> (i32, i32) {
    %c0_i32 = arith.constant 0 : i32
    %c0_i32_0 = arith.constant 0 : i32
    %c0_i32_1 = arith.constant 0 : i32
    return %c0_i32, %c0_i32_0 : i32, i32
  }
  func.func @transform_3(%arg0: i32) -> (i32, i32) {
    %c0_i32 = arith.constant 0 : i32
    %c0_i32_0 = arith.constant 0 : i32
    %c0_i32_1 = arith.constant 0 : i32
    return %c0_i32, %c0_i32_0 : i32, i32
  }
  func.func @transform_4(%arg0: i32) -> (i32, i32) {
    %c0_i32 = arith.constant 0 : i32
    %c0_i32_0 = arith.constant 0 : i32
    %c0_i32_1 = arith.constant 0 : i32
    return %c0_i32, %c0_i32_0 : i32, i32
  }
  func.func @transform_5(%arg0: i32) -> (i32, i32) {
    %c0_i32 = arith.constant 0 : i32
    %c0_i32_0 = arith.constant 0 : i32
    %c0_i32_1 = arith.constant 0 : i32
    return %c0_i32, %c0_i32_0 : i32, i32
  }
  func.func @transform_6(%arg0: i32) -> (i32, i32) {
    %c0_i32 = arith.constant 0 : i32
    %c0_i32_0 = arith.constant 0 : i32
    %c0_i32_1 = arith.constant 0 : i32
    return %c0_i32, %c0_i32_0 : i32, i32
  }
  func.func @transform_7(%arg0: i32) -> (i32, i32) {
    %c0_i32 = arith.constant 0 : i32
    %c0_i32_0 = arith.constant 0 : i32
    return %arg0, %c0_i32 : i32, i32
  }
}

</mosaic_0001>

<llo_original>
// kernel: tpu_custom_call.1
$region0: #{tpu_custom_call.1}
  #allocation0 [shape = 'u32[]', space=smem, size = 0x4, offset = 0x4, fixed_abs, tag = 'smem constant byte address 0x4 - core index']
  #allocation1 [shape = 'u32[144,128]{1,0:T(1,128)}', space=vmem, size = 0x12000, scoped, tag = 'internal scratch']
  %s0 = inlined_call_operand.hbm [shape: f32[8,1024], index: 0, kind: input, shape index: {}]
  %s1 = inlined_call_operand.hbm [shape: f32[1024,256], index: 1, kind: input, shape index: {}]
  %s2 = inlined_call_operand.vmem [shape: f32[1,256], index: 2, kind: input, shape index: {}]
  %s3 = inlined_call_operand.hbm [shape: f32[256,256], index: 3, kind: input, shape index: {}]
  %s4 = inlined_call_operand.vmem [shape: f32[1,256], index: 4, kind: input, shape index: {}]
  %s5 = inlined_call_operand.hbm [shape: f32[256,128], index: 5, kind: input, shape index: {}]
  %s6 = inlined_call_operand.vmem [shape: f32[1,128], index: 6, kind: input, shape index: {}]
  %s7 = inlined_call_operand.hbm [shape: f32[8,128], index: 7, kind: output, shape index: {}]
  %s8 = sld [smem:[#allocation0]]
  $region54: #{tpu_custom_call.1} parent=0
    _
  %s10 = ssub.s32 1, %s8
  %s11 = scalar_select 0, %s10, %s8
  $region1: #{tpu_custom_call.1} parent=0
    #allocation2 [shape = 'u8[32768]{0}', space=vmem, size = 0x8000, scoped, tag = 'input window, operand 0, single buffered']
    #allocation3 [shape = 's32[1]{0}', space=sflag, size = 0x4, scoped, tag = 'scoped memory for tpu_custom_call.1']
    #allocation4 [shape = 's32[1]{0}', space=sflag, size = 0x4, scoped, tag = 'scoped memory for tpu_custom_call.1']
    #allocation5 [shape = 'u8[1048576]{0}', space=vmem, size = 0x100000, scoped, tag = 'input window, operand 1, single buffered']
    #allocation6 [shape = 's32[1]{0}', space=sflag, size = 0x4, scoped, tag = 'scoped memory for tpu_custom_call.1']
    #allocation7 [shape = 'u8[262144]{0}', space=vmem, size = 0x40000, scoped, tag = 'input window, operand 3, single buffered']
    #allocation8 [shape = 'u8[131072]{0}', space=vmem, size = 0x20000, scoped, tag = 'input window, operand 5, single buffered']
    #allocation9 [shape = 's32[1]{0}', space=sflag, size = 0x4, scoped, tag = 'scoped memory for tpu_custom_call.1']
    #allocation10 [shape = 'u8[4096]{0}', space=vmem, size = 0x1000, scoped, tag = 'output window, operand 0, single buffered']
    %12 = vsyncpa [#allocation3], 0
    %13 = vsyncpa [#allocation6], 0
    %14 = vsyncpa [#allocation9], 0
    %15 = vsyncpa [#allocation4], 0
    // Predicated region
    $region2: #{tpu_custom_call.1} parent=1 // pred_check
      _
    $region3: #{tpu_custom_call.1} parent=1 // pred_check_branch
      %17 = sbr.rel (0) target = $region5
    $region4: #{tpu_custom_call.1} parent=1 // pred_region
      %s19 = ssub.s32 1024, 1024
      %20 = vsyncadd [#allocation3], %s19
      %s22 = sshll.u32 [#allocation2], 4
      %s23 = int_to_ptr.vmem [resolvable:$true] %s22
      %25 = dma.hbm_to_vmem [thread:$0]  %s0, 1024, %s23, [#allocation3]
    $region5: #{tpu_custom_call.1} parent=1 // pred_fallthru
      _
    // Predicated region
    $region6: #{tpu_custom_call.1} parent=1 // pred_check
      _
    $region7: #{tpu_custom_call.1} parent=1 // pred_check_branch
      %27 = sbr.rel (0) target = $region9
    $region8: #{tpu_custom_call.1} parent=1 // pred_region
      %s29 = ssub.s32 32768, 32768
      %30 = vsyncadd [#allocation6], %s29
      %s31 = sshll.u32 [#allocation5], 4
      %s32 = int_to_ptr.vmem [resolvable:$true] %s31
      %37 = dma.hbm_to_vmem [thread:$0]  %s1, 32768, %s32, [#allocation6], 256, 256, 16
    $region9: #{tpu_custom_call.1} parent=1 // pred_fallthru
      _
    // Predicated region
    $region10: #{tpu_custom_call.1} parent=1 // pred_check
      _
    $region11: #{tpu_custom_call.1} parent=1 // pred_check_branch
      %39 = sbr.rel (0) target = $region13
    $region12: #{tpu_custom_call.1} parent=1 // pred_region
      _
    $region13: #{tpu_custom_call.1} parent=1 // pred_fallthru
      _
    // Predicated region
    $region14: #{tpu_custom_call.1} parent=1 // pred_check
      _
    $region15: #{tpu_custom_call.1} parent=1 // pred_check_branch
      %41 = sbr.rel (0) target = $region17
    $region16: #{tpu_custom_call.1} parent=1 // pred_region
      %s43 = ssub.s32 8192, 8192
      %44 = vsyncadd [#allocation6], %s43
      %s45 = sshll.u32 [#allocation7], 4
      %s46 = int_to_ptr.vmem [resolvable:$true] %s45
      %51 = dma.hbm_to_vmem [thread:$0]  %s3, 8192, %s46, [#allocation6], 256, 256, 16
    $region17: #{tpu_custom_call.1} parent=1 // pred_fallthru
      _
    // Predicated region
    $region18: #{tpu_custom_call.1} parent=1 // pred_check
      _
    $region19: #{tpu_custom_call.1} parent=1 // pred_check_branch
      %53 = sbr.rel (0) target = $region21
    $region20: #{tpu_custom_call.1} parent=1 // pred_region
      _
    $region21: #{tpu_custom_call.1} parent=1 // pred_fallthru
      _
    // Predicated region
    $region22: #{tpu_custom_call.1} parent=1 // pred_check
      _
    $region23: #{tpu_custom_call.1} parent=1 // pred_check_branch
      %55 = sbr.rel (0) target = $region25
    $region24: #{tpu_custom_call.1} parent=1 // pred_region
      %s57 = ssub.s32 4096, 4096
      %58 = vsyncadd [#allocation9], %s57
      %s59 = sshll.u32 [#allocation8], 4
      %s60 = int_to_ptr.vmem [resolvable:$true] %s59
      %65 = dma.hbm_to_vmem [thread:$0]  %s5, 4096, %s60, [#allocation9], 128, 128, 8
    $region25: #{tpu_custom_call.1} parent=1 // pred_fallthru
      _
    // Predicated region
    $region26: #{tpu_custom_call.1} parent=1 // pred_check
      _
    $region27: #{tpu_custom_call.1} parent=1 // pred_check_branch
      %67 = sbr.rel (0) target = $region29
    $region28: #{tpu_custom_call.1} parent=1 // pred_region
      _
    $region29: #{tpu_custom_call.1} parent=1 // pred_fallthru
      _
    // Predicated region
    $region30: #{tpu_custom_call.1} parent=1 // pred_check
      _
    $region31: #{tpu_custom_call.1} parent=1 // pred_check_branch
      %69 = sbr.rel (0) target = $region33
    $region32: #{tpu_custom_call.1} parent=1 // pred_region
      %70 = dma.done [#allocation3], 1024
    $region33: #{tpu_custom_call.1} parent=1 // pred_fallthru
      _
    // Predicated region
    $region34: #{tpu_custom_call.1} parent=1 // pred_check
      _
    $region35: #{tpu_custom_call.1} parent=1 // pred_check_branch
      %72 = sbr.rel (0) target = $region37
    $region36: #{tpu_custom_call.1} parent=1 // pred_region
      %73 = dma.done [#allocation6], 32768
    $region37: #{tpu_custom_call.1} parent=1 // pred_fallthru
      _
    // Predicated region
    $region38: #{tpu_custom_call.1} parent=1 // pred_check
      _
    $region39: #{tpu_custom_call.1} parent=1 // pred_check_branch
      %75 = sbr.rel (0) target = $region41
    $region40: #{tpu_custom_call.1} parent=1 // pred_region
      %76 = dma.done [#allocation6], 8192
    $region41: #{tpu_custom_call.1} parent=1 // pred_fallthru
      _
    // Predicated region
    $region42: #{tpu_custom_call.1} parent=1 // pred_check
      _
    $region43: #{tpu_custom_call.1} parent=1 // pred_check_branch
      %78 = sbr.rel (0) target = $region45
    $region44: #{tpu_custom_call.1} parent=1 // pred_region
      %79 = dma.done [#allocation9], 4096
    $region45: #{tpu_custom_call.1} parent=1 // pred_fallthru
      _
    %v80 = vld [vmem:[#allocation2] sm:$0xff]
    %v81 = vld [vmem:[#allocation2 + $0x8] sm:$0xff]
    %v82 = vld [vmem:[#allocation2 + $0x10] sm:$0xff]
    %v83 = vld [vmem:[#allocation2 + $0x18] sm:$0xff]
    %v84 = vld [vmem:[#allocation2 + $0x20] sm:$0xff]
    %v85 = vld [vmem:[#allocation2 + $0x28] sm:$0xff]
    %v86 = vld [vmem:[#allocation2 + $0x30] sm:$0xff]
    %v87 = vld [vmem:[#allocation2 + $0x38] sm:$0xff]
    %v88 = vld [vmem:[#allocation5] sm:$0xff]
    %v89 = vld [vmem:[#allocation5 + $0x8] sm:$0xff]
    %v90 = vld [vmem:[#allocation5 + $0x10] sm:$0xff]
    %v91 = vld [vmem:[#allocation5 + $0x18] sm:$0xff]
    %v92 = vld [vmem:[#allocation5 + $0x20] sm:$0xff]
    %v93 = vld [vmem:[#allocation5 + $0x28] sm:$0xff]
    %v94 = vld [vmem:[#allocation5 + $0x30] sm:$0xff]
    %v95 = vld [vmem:[#allocation5 + $0x38] sm:$0xff]
    %v96 = vld [vmem:[#allocation5 + $0x40] sm:$0xff]
    %v97 = vld [vmem:[#allocation5 + $0x48] sm:$0xff]
    %v98 = vld [vmem:[#allocation5 + $0x50] sm:$0xff]
    %v99 = vld [vmem:[#allocation5 + $0x58] sm:$0xff]
    %v100 = vld [vmem:[#allocation5 + $0x60] sm:$0xff]
    %v101 = vld [vmem:[#allocation5 + $0x68] sm:$0xff]
    %v102 = vld [vmem:[#allocation5 + $0x70] sm:$0xff]
    %v103 = vld [vmem:[#allocation5 + $0x78] sm:$0xff]
    %v104 = vld [vmem:[#allocation5 + $0x80] sm:$0xff]
    %v105 = vld [vmem:[#allocation5 + $0x88] sm:$0xff]
    %v106 = vld [vmem:[#allocation5 + $0x90] sm:$0xff]
    %v107 = vld [vmem:[#allocation5 + $0x98] sm:$0xff]
    %v108 = vld [vmem:[#allocation5 + $0xa0] sm:$0xff]
    %v109 = vld [vmem:[#allocation5 + $0xa8] sm:$0xff]
    %v110 = vld [vmem:[#allocation5 + $0xb0] sm:$0xff]
    %v111 = vld [vmem:[#allocation5 + $0xb8] sm:$0xff]
    %v112 = vld [vmem:[#allocation5 + $0xc0] sm:$0xff]
    %v113 = vld [vmem:[#allocation5 + $0xc8] sm:$0xff]
    %v114 = vld [vmem:[#allocation5 + $0xd0] sm:$0xff]
    %v115 = vld [vmem:[#allocation5 + $0xd8] sm:$0xff]
    %v116 = vld [vmem:[#allocation5 + $0xe0] sm:$0xff]
    %v117 = vld [vmem:[#allocation5 + $0xe8] sm:$0xff]
    %v118 = vld [vmem:[#allocation5 + $0xf0] sm:$0xff]
    %v119 = vld [vmem:[#allocation5 + $0xf8] sm:$0xff]
    %v120 = vld [vmem:[#allocation5 + $0x100] sm:$0xff]
    %v121 = vld [vmem:[#allocation5 + $0x108] sm:$0xff]
    %v122 = vld [vmem:[#allocation5 + $0x110] sm:$0xff]
    %v123 = vld [vmem:[#allocation5 + $0x118] sm:$0xff]
    %v124 = vld [vmem:[#allocation5 + $0x120] sm:$0xff]
    %v125 = vld [vmem:[#allocation5 + $0x128] sm:$0xff]
    %v126 = vld [vmem:[#allocation5 + $0x130] sm:$0xff]
    %v127 = vld [vmem:[#allocation5 + $0x138] sm:$0xff]
    %v128 = vld [vmem:[#allocation5 + $0x140] sm:$0xff]
    %v129 = vld [vmem:[#allocation5 + $0x148] sm:$0xff]
    %v130 = vld [vmem:[#allocation5 + $0x150] sm:$0xff]
    %v131 = vld [vmem:[#allocation5 + $0x158] sm:$0xff]
    %v132 = vld [vmem:[#allocation5 + $0x160] sm:$0xff]
    %v133 = vld [vmem:[#allocation5 + $0x168] sm:$0xff]
    %v134 = vld [vmem:[#allocation5 + $0x170] sm:$0xff]
    %v135 = vld [vmem:[#allocation5 + $0x178] sm:$0xff]
    %v136 = vld [vmem:[#allocation5 + $0x180] sm:$0xff]
    %v137 = vld [vmem:[#allocation5 + $0x188] sm:$0xff]
    %v138 = vld [vmem:[#allocation5 + $0x190] sm:$0xff]
    %v139 = vld [vmem:[#allocation5 + $0x198] sm:$0xff]
    %v140 = vld [vmem:[#allocation5 + $0x1a0] sm:$0xff]
    %v141 = vld [vmem:[#allocation5 + $0x1a8] sm:$0xff]
    %v142 = vld [vmem:[#allocation5 + $0x1b0] sm:$0xff]
    %v143 = vld [vmem:[#allocation5 + $0x1b8] sm:$0xff]
    %v144 = vld [vmem:[#allocation5 + $0x1c0] sm:$0xff]
    %v145 = vld [vmem:[#allocation5 + $0x1c8] sm:$0xff]
    %v146 = vld [vmem:[#allocation5 + $0x1d0] sm:$0xff]
    %v147 = vld [vmem:[#allocation5 + $0x1d8] sm:$0xff]
    %v148 = vld [vmem:[#allocation5 + $0x1e0] sm:$0xff]
    %v149 = vld [vmem:[#allocation5 + $0x1e8] sm:$0xff]
    %v150 = vld [vmem:[#allocation5 + $0x1f0] sm:$0xff]
    %v151 = vld [vmem:[#allocation5 + $0x1f8] sm:$0xff]
    %v152 = vld [vmem:[#allocation5 + $0x200] sm:$0xff]
    %v153 = vld [vmem:[#allocation5 + $0x208] sm:$0xff]
    %v154 = vld [vmem:[#allocation5 + $0x210] sm:$0xff]
    %v155 = vld [vmem:[#allocation5 + $0x218] sm:$0xff]
    %v156 = vld [vmem:[#allocation5 + $0x220] sm:$0xff]
    %v157 = vld [vmem:[#allocation5 + $0x228] sm:$0xff]
    %v158 = vld [vmem:[#allocation5 + $0x230] sm:$0xff]
    %v159 = vld [vmem:[#allocation5 + $0x238] sm:$0xff]
    %v160 = vld [vmem:[#allocation5 + $0x240] sm:$0xff]
    %v161 = vld [vmem:[#allocation5 + $0x248] sm:$0xff]
    %v162 = vld [vmem:[#allocation5 + $0x250] sm:$0xff]
    %v163 = vld [vmem:[#allocation5 + $0x258] sm:$0xff]
    %v164 = vld [vmem:[#allocation5 + $0x260] sm:$0xff]
    %v165 = vld [vmem:[#allocation5 + $0x268] sm:$0xff]
    %v166 = vld [vmem:[#allocation5 + $0x270] sm:$0xff]
    %v167 = vld [vmem:[#allocation5 + $0x278] sm:$0xff]
    %v168 = vld [vmem:[#allocation5 + $0x280] sm:$0xff]
    %v169 = vld [vmem:[#allocation5 + $0x288] sm:$0xff]
    %v170 = vld [vmem:[#allocation5 + $0x290] sm:$0xff]
    %v171 = vld [vmem:[#allocation5 + $0x298] sm:$0xff]
    %v172 = vld [vmem:[#allocation5 + $0x2a0] sm:$0xff]
    %v173 = vld [vmem:[#allocation5 + $0x2a8] sm:$0xff]
    %v174 = vld [vmem:[#allocation5 + $0x2b0] sm:$0xff]
    %v175 = vld [vmem:[#allocation5 + $0x2b8] sm:$0xff]
    %v176 = vld [vmem:[#allocation5 + $0x2c0] sm:$0xff]
    %v177 = vld [vmem:[#allocation5 + $0x2c8] sm:$0xff]
    %v178 = vld [vmem:[#allocation5 + $0x2d0] sm:$0xff]
    %v179 = vld [vmem:[#allocation5 + $0x2d8] sm:$0xff]
    %v180 = vld [vmem:[#allocation5 + $0x2e0] sm:$0xff]
    %v181 = vld [vmem:[#allocation5 + $0x2e8] sm:$0xff]
    %v182 = vld [vmem:[#allocation5 + $0x2f0] sm:$0xff]
    %v183 = vld [vmem:[#allocation5 + $0x2f8] sm:$0xff]
    %v184 = vld [vmem:[#allocation5 + $0x300] sm:$0xff]
    %v185 = vld [vmem:[#allocation5 + $0x308] sm:$0xff]
    %v186 = vld [vmem:[#allocation5 + $0x310] sm:$0xff]
    %v187 = vld [vmem:[#allocation5 + $0x318] sm:$0xff]
    %v188 = vld [vmem:[#allocation5 + $0x320] sm:$0xff]
    %v189 = vld [vmem:[#allocation5 + $0x328] sm:$0xff]
    %v190 = vld [vmem:[#allocation5 + $0x330] sm:$0xff]
    %v191 = vld [vmem:[#allocation5 + $0x338] sm:$0xff]
    %v192 = vld [vmem:[#allocation5 + $0x340] sm:$0xff]
    %v193 = vld [vmem:[#allocation5 + $0x348] sm:$0xff]
    %v194 = vld [vmem:[#allocation5 + $0x350] sm:$0xff]
    %v195 = vld [vmem:[#allocation5 + $0x358] sm:$0xff]
    %v196 = vld [vmem:[#allocation5 + $0x360] sm:$0xff]
    %v197 = vld [vmem:[#allocation5 + $0x368] sm:$0xff]
    %v198 = vld [vmem:[#allocation5 + $0x370] sm:$0xff]
    %v199 = vld [vmem:[#allocation5 + $0x378] sm:$0xff]
    %v200 = vld [vmem:[#allocation5 + $0x380] sm:$0xff]
    %v201 = vld [vmem:[#allocation5 + $0x388] sm:$0xff]
    %v202 = vld [vmem:[#allocation5 + $0x390] sm:$0xff]
    %v203 = vld [vmem:[#allocation5 + $0x398] sm:$0xff]
    %v204 = vld [vmem:[#allocation5 + $0x3a0] sm:$0xff]
    %v205 = vld [vmem:[#allocation5 + $0x3a8] sm:$0xff]
    %v206 = vld [vmem:[#allocation5 + $0x3b0] sm:$0xff]
    %v207 = vld [vmem:[#allocation5 + $0x3b8] sm:$0xff]
    %v208 = vld [vmem:[#allocation5 + $0x3c0] sm:$0xff]
    %v209 = vld [vmem:[#allocation5 + $0x3c8] sm:$0xff]
    %v210 = vld [vmem:[#allocation5 + $0x3d0] sm:$0xff]
    %v211 = vld [vmem:[#allocation5 + $0x3d8] sm:$0xff]
    %v212 = vld [vmem:[#allocation5 + $0x3e0] sm:$0xff]
    %v213 = vld [vmem:[#allocation5 + $0x3e8] sm:$0xff]
    %v214 = vld [vmem:[#allocation5 + $0x3f0] sm:$0xff]
    %v215 = vld [vmem:[#allocation5 + $0x3f8] sm:$0xff]
    %v216 = vld [vmem:[#allocation5 + $0x400] sm:$0xff]
    %v217 = vld [vmem:[#allocation5 + $0x408] sm:$0xff]
    %v218 = vld [vmem:[#allocation5 + $0x410] sm:$0xff]
    %v219 = vld [vmem:[#allocation5 + $0x418] sm:$0xff]
    %v220 = vld [vmem:[#allocation5 + $0x420] sm:$0xff]
    %v221 = vld [vmem:[#allocation5 + $0x428] sm:$0xff]
    %v222 = vld [vmem:[#allocation5 + $0x430] sm:$0xff]
    %v223 = vld [vmem:[#allocation5 + $0x438] sm:$0xff]
    %v224 = vld [vmem:[#allocation5 + $0x440] sm:$0xff]
    %v225 = vld [vmem:[#allocation5 + $0x448] sm:$0xff]
    %v226 = vld [vmem:[#allocation5 + $0x450] sm:$0xff]
    %v227 = vld [vmem:[#allocation5 + $0x458] sm:$0xff]
    %v228 = vld [vmem:[#allocation5 + $0x460] sm:$0xff]
    %v229 = vld [vmem:[#allocation5 + $0x468] sm:$0xff]
    %v230 = vld [vmem:[#allocation5 + $0x470] sm:$0xff]
    %v231 = vld [vmem:[#allocation5 + $0x478] sm:$0xff]
    %v232 = vld [vmem:[#allocation5 + $0x480] sm:$0xff]
    %v233 = vld [vmem:[#allocation5 + $0x488] sm:$0xff]
    %v234 = vld [vmem:[#allocation5 + $0x490] sm:$0xff]
    %v235 = vld [vmem:[#allocation5 + $0x498] sm:$0xff]
    %v236 = vld [vmem:[#allocation5 + $0x4a0] sm:$0xff]
    %v237 = vld [vmem:[#allocation5 + $0x4a8] sm:$0xff]
    %v238 = vld [vmem:[#allocation5 + $0x4b0] sm:$0xff]
    %v239 = vld [vmem:[#allocation5 + $0x4b8] sm:$0xff]
    %v240 = vld [vmem:[#allocation5 + $0x4c0] sm:$0xff]
    %v241 = vld [vmem:[#allocation5 + $0x4c8] sm:$0xff]
    %v242 = vld [vmem:[#allocation5 + $0x4d0] sm:$0xff]
    %v243 = vld [vmem:[#allocation5 + $0x4d8] sm:$0xff]
    %v244 = vld [vmem:[#allocation5 + $0x4e0] sm:$0xff]
    %v245 = vld [vmem:[#allocation5 + $0x4e8] sm:$0xff]
    %v246 = vld [vmem:[#allocation5 + $0x4f0] sm:$0xff]
    %v247 = vld [vmem:[#allocation5 + $0x4f8] sm:$0xff]
    %v248 = vld [vmem:[#allocation5 + $0x500] sm:$0xff]
    %v249 = vld [vmem:[#allocation5 + $0x508] sm:$0xff]
    %v250 = vld [vmem:[#allocation5 + $0x510] sm:$0xff]
    %v251 = vld [vmem:[#allocation5 + $0x518] sm:$0xff]
    %v252 = vld [vmem:[#allocation5 + $0x520] sm:$0xff]
    %v253 = vld [vmem:[#allocation5 + $0x528] sm:$0xff]
    %v254 = vld [vmem:[#allocation5 + $0x530] sm:$0xff]
    %v255 = vld [vmem:[#allocation5 + $0x538] sm:$0xff]
    %v256 = vld [vmem:[#allocation5 + $0x540] sm:$0xff]
    %v257 = vld [vmem:[#allocation5 + $0x548] sm:$0xff]
    %v258 = vld [vmem:[#allocation5 + $0x550] sm:$0xff]
    %v259 = vld [vmem:[#allocation5 + $0x558] sm:$0xff]
    %v260 = vld [vmem:[#allocation5 + $0x560] sm:$0xff]
    %v261 = vld [vmem:[#allocation5 + $0x568] sm:$0xff]
    %v262 = vld [vmem:[#allocation5 + $0x570] sm:$0xff]
    %v263 = vld [vmem:[#allocation5 + $0x578] sm:$0xff]
    %v264 = vld [vmem:[#allocation5 + $0x580] sm:$0xff]
    %v265 = vld [vmem:[#allocation5 + $0x588] sm:$0xff]
    %v266 = vld [vmem:[#allocation5 + $0x590] sm:$0xff]
    %v267 = vld [vmem:[#allocation5 + $0x598] sm:$0xff]
    %v268 = vld [vmem:[#allocation5 + $0x5a0] sm:$0xff]
    %v269 = vld [vmem:[#allocation5 + $0x5a8] sm:$0xff]
    %v270 = vld [vmem:[#allocation5 + $0x5b0] sm:$0xff]
    %v271 = vld [vmem:[#allocation5 + $0x5b8] sm:$0xff]
    %v272 = vld [vmem:[#allocation5 + $0x5c0] sm:$0xff]
    %v273 = vld [vmem:[#allocation5 + $0x5c8] sm:$0xff]
    %v274 = vld [vmem:[#allocation5 + $0x5d0] sm:$0xff]
    %v275 = vld [vmem:[#allocation5 + $0x5d8] sm:$0xff]
    %v276 = vld [vmem:[#allocation5 + $0x5e0] sm:$0xff]
    %v277 = vld [vmem:[#allocation5 + $0x5e8] sm:$0xff]
    %v278 = vld [vmem:[#allocation5 + $0x5f0] sm:$0xff]
    %v279 = vld [vmem:[#allocation5 + $0x5f8] sm:$0xff]
    %v280 = vld [vmem:[#allocation5 + $0x600] sm:$0xff]
    %v281 = vld [vmem:[#allocation5 + $0x608] sm:$0xff]
    %v282 = vld [vmem:[#allocation5 + $0x610] sm:$0xff]
    %v283 = vld [vmem:[#allocation5 + $0x618] sm:$0xff]
    %v284 = vld [vmem:[#allocation5 + $0x620] sm:$0xff]
    %v285 = vld [vmem:[#allocation5 + $0x628] sm:$0xff]
    %v286 = vld [vmem:[#allocation5 + $0x630] sm:$0xff]
    %v287 = vld [vmem:[#allocation5 + $0x638] sm:$0xff]
    %v288 = vld [vmem:[#allocation5 + $0x640] sm:$0xff]
    %v289 = vld [vmem:[#allocation5 + $0x648] sm:$0xff]
    %v290 = vld [vmem:[#allocation5 + $0x650] sm:$0xff]
    %v291 = vld [vmem:[#allocation5 + $0x658] sm:$0xff]
    %v292 = vld [vmem:[#allocation5 + $0x660] sm:$0xff]
    %v293 = vld [vmem:[#allocation5 + $0x668] sm:$0xff]
    %v294 = vld [vmem:[#allocation5 + $0x670] sm:$0xff]
    %v295 = vld [vmem:[#allocation5 + $0x678] sm:$0xff]
    %v296 = vld [vmem:[#allocation5 + $0x680] sm:$0xff]
    %v297 = vld [vmem:[#allocation5 + $0x688] sm:$0xff]
    %v298 = vld [vmem:[#allocation5 + $0x690] sm:$0xff]
    %v299 = vld [vmem:[#allocation5 + $0x698] sm:$0xff]
    %v300 = vld [vmem:[#allocation5 + $0x6a0] sm:$0xff]
    %v301 = vld [vmem:[#allocation5 + $0x6a8] sm:$0xff]
    %v302 = vld [vmem:[#allocation5 + $0x6b0] sm:$0xff]
    %v303 = vld [vmem:[#allocation5 + $0x6b8] sm:$0xff]
    %v304 = vld [vmem:[#allocation5 + $0x6c0] sm:$0xff]
    %v305 = vld [vmem:[#allocation5 + $0x6c8] sm:$0xff]
    %v306 = vld [vmem:[#allocation5 + $0x6d0] sm:$0xff]
    %v307 = vld [vmem:[#allocation5 + $0x6d8] sm:$0xff]
    %v308 = vld [vmem:[#allocation5 + $0x6e0] sm:$0xff]
    %v309 = vld [vmem:[#allocation5 + $0x6e8] sm:$0xff]
    %v310 = vld [vmem:[#allocation5 + $0x6f0] sm:$0xff]
    %v311 = vld [vmem:[#allocation5 + $0x6f8] sm:$0xff]
    %v312 = vld [vmem:[#allocation5 + $0x700] sm:$0xff]
    %v313 = vld [vmem:[#allocation5 + $0x708] sm:$0xff]
    %v314 = vld [vmem:[#allocation5 + $0x710] sm:$0xff]
    %v315 = vld [vmem:[#allocation5 + $0x718] sm:$0xff]
    %v316 = vld [vmem:[#allocation5 + $0x720] sm:$0xff]
    %v317 = vld [vmem:[#allocation5 + $0x728] sm:$0xff]
    %v318 = vld [vmem:[#allocation5 + $0x730] sm:$0xff]
    %v319 = vld [vmem:[#allocation5 + $0x738] sm:$0xff]
    %v320 = vld [vmem:[#allocation5 + $0x740] sm:$0xff]
    %v321 = vld [vmem:[#allocation5 + $0x748] sm:$0xff]
    %v322 = vld [vmem:[#allocation5 + $0x750] sm:$0xff]
    %v323 = vld [vmem:[#allocation5 + $0x758] sm:$0xff]
    %v324 = vld [vmem:[#allocation5 + $0x760] sm:$0xff]
    %v325 = vld [vmem:[#allocation5 + $0x768] sm:$0xff]
    %v326 = vld [vmem:[#allocation5 + $0x770] sm:$0xff]
    %v327 = vld [vmem:[#allocation5 + $0x778] sm:$0xff]
    %v328 = vld [vmem:[#allocation5 + $0x780] sm:$0xff]
    %v329 = vld [vmem:[#allocation5 + $0x788] sm:$0xff]
    %v330 = vld [vmem:[#allocation5 + $0x790] sm:$0xff]
    %v331 = vld [vmem:[#allocation5 + $0x798] sm:$0xff]
    %v332 = vld [vmem:[#allocation5 + $0x7a0] sm:$0xff]
    %v333 = vld [vmem:[#allocation5 + $0x7a8] sm:$0xff]
    %v334 = vld [vmem:[#allocation5 + $0x7b0] sm:$0xff]
    %v335 = vld [vmem:[#allocation5 + $0x7b8] sm:$0xff]
    %v336 = vld [vmem:[#allocation5 + $0x7c0] sm:$0xff]
    %v337 = vld [vmem:[#allocation5 + $0x7c8] sm:$0xff]
    %v338 = vld [vmem:[#allocation5 + $0x7d0] sm:$0xff]
    %v339 = vld [vmem:[#allocation5 + $0x7d8] sm:$0xff]
    %v340 = vld [vmem:[#allocation5 + $0x7e0] sm:$0xff]
    %v341 = vld [vmem:[#allocation5 + $0x7e8] sm:$0xff]
    %v342 = vld [vmem:[#allocation5 + $0x7f0] sm:$0xff]
    %v343 = vld [vmem:[#allocation5 + $0x7f8] sm:$0xff]
    %v344 = vld [vmem:[%s2] sm:$0x3]
    %v346 = vlaneseq
    %v347 = vshrl.u32 %v346, 7
    %v348 = vsub.s32 0, %v347
    %v349 = vrot.slane %v344, %v348
    %v350 = vlaneseq
    %v351 = vshrl.u32 %v350, 7
    %v352 = vsub.s32 1, %v351
    %v353 = vrot.slane %v344, %v352
    %356 = vmatprep.subr.mxu0 %v89
    %357 = vmatpush1.msra.mxu0 %v88
    %358 = vmatprep.subr.mxu0 %v91
    %359 = vmatpush1.msra.mxu0 %v90
    %360 = vmatprep.subr.mxu0 %v93
    %361 = vmatpush1.msra.mxu0 %v92
    %362 = vmatprep.subr.mxu0 %v95
    %363 = vmatpush1.msra.mxu0 %v94
    %364 = vmatprep.subr.mxu0 %v97
    %365 = vmatpush1.msra.mxu0 %v96
    %366 = vmatprep.subr.mxu0 %v99
    %367 = vmatpush1.msra.mxu0 %v98
    %368 = vmatprep.subr.mxu0 %v101
    %369 = vmatpush1.msra.mxu0 %v100
    %370 = vmatprep.subr.mxu0 %v103
    %371 = vmatpush1.msra.mxu0 %v102
    %372 = vmatprep.subr.mxu0 %v105
    %373 = vmatpush1.msra.mxu0 %v104
    %374 = vmatprep.subr.mxu0 %v107
    %375 = vmatpush1.msra.mxu0 %v106
    %376 = vmatprep.subr.mxu0 %v109
    %377 = vmatpush1.msra.mxu0 %v108
    %378 = vmatprep.subr.mxu0 %v111
    %379 = vmatpush1.msra.mxu0 %v110
    %380 = vmatprep.subr.mxu0 %v113
    %381 = vmatpush1.msra.mxu0 %v112
    %382 = vmatprep.subr.mxu0 %v115
    %383 = vmatpush1.msra.mxu0 %v114
    %384 = vmatprep.subr.mxu0 %v117
    %385 = vmatpush1.msra.mxu0 %v116
    %386 = vmatprep.subr.mxu0 %v119
    %387 = vmatpush1.msra.mxu0 %v118
    %388 = vmatprep.subr.mxu0 %v121
    %389 = vmatpush1.msra.mxu0 %v120
    %390 = vmatprep.subr.mxu0 %v123
    %391 = vmatpush1.msra.mxu0 %v122
    %392 = vmatprep.subr.mxu0 %v125
    %393 = vmatpush1.msra.mxu0 %v124
    %394 = vmatprep.subr.mxu0 %v127
    %395 = vmatpush1.msra.mxu0 %v126
    %396 = vmatprep.subr.mxu0 %v129
    %397 = vmatpush1.msra.mxu0 %v128
    %398 = vmatprep.subr.mxu0 %v131
    %399 = vmatpush1.msra.mxu0 %v130
    %400 = vmatprep.subr.mxu0 %v133
    %401 = vmatpush1.msra.mxu0 %v132
    %402 = vmatprep.subr.mxu0 %v135
    %403 = vmatpush1.msra.mxu0 %v134
    %404 = vmatprep.subr.mxu0 %v137
    %405 = vmatpush1.msra.mxu0 %v136
    %406 = vmatprep.subr.mxu0 %v139
    %407 = vmatpush1.msra.mxu0 %v138
    %408 = vmatprep.subr.mxu0 %v141
    %409 = vmatpush1.msra.mxu0 %v140
    %410 = vmatprep.subr.mxu0 %v143
    %411 = vmatpush1.msra.mxu0 %v142
    %412 = vmatprep.subr.mxu0 %v145
    %413 = vmatpush1.msra.mxu0 %v144
    %414 = vmatprep.subr.mxu0 %v147
    %415 = vmatpush1.msra.mxu0 %v146
    %416 = vmatprep.subr.mxu0 %v149
    %417 = vmatpush1.msra.mxu0 %v148
    %418 = vmatprep.subr.mxu0 %v151
    %419 = vmatpush1.msra.mxu0 %v150
    %420 = vmatprep.mubr.f32.mxu0 %v81
    %421 = vmatmul.mubr.f32.gmra.mrb[0].mxu0 %v80
    %v422 = vpop.f32.mrb[0].mxu0
    %v423 = vadd.f32 %v349, %v422
    %v424 = vpop.f32.mrb[0].mxu0
    %v425 = vadd.f32 %v353, %v424
    %426 = vdwg.mxu0
    %427 = vmatprep.subr.mxu0 %v153
    %428 = vmatpush1.msra.mxu0 %v152
    %429 = vmatprep.subr.mxu0 %v155
    %430 = vmatpush1.msra.mxu0 %v154
    %431 = vmatprep.subr.mxu0 %v157
    %432 = vmatpush1.msra.mxu0 %v156
    %433 = vmatprep.subr.mxu0 %v159
    %434 = vmatpush1.msra.mxu0 %v158
    %435 = vmatprep.subr.mxu0 %v161
    %436 = vmatpush1.msra.mxu0 %v160
    %437 = vmatprep.subr.mxu0 %v163
    %438 = vmatpush1.msra.mxu0 %v162
    %439 = vmatprep.subr.mxu0 %v165
    %440 = vmatpush1.msra.mxu0 %v164
    %441 = vmatprep.subr.mxu0 %v167
    %442 = vmatpush1.msra.mxu0 %v166
    %443 = vmatprep.subr.mxu0 %v169
    %444 = vmatpush1.msra.mxu0 %v168
    %445 = vmatprep.subr.mxu0 %v171
    %446 = vmatpush1.msra.mxu0 %v170
    %447 = vmatprep.subr.mxu0 %v173
    %448 = vmatpush1.msra.mxu0 %v172
    %449 = vmatprep.subr.mxu0 %v175
    %450 = vmatpush1.msra.mxu0 %v174
    %451 = vmatprep.subr.mxu0 %v177
    %452 = vmatpush1.msra.mxu0 %v176
    %453 = vmatprep.subr.mxu0 %v179
    %454 = vmatpush1.msra.mxu0 %v178
    %455 = vmatprep.subr.mxu0 %v181
    %456 = vmatpush1.msra.mxu0 %v180
    %457 = vmatprep.subr.mxu0 %v183
    %458 = vmatpush1.msra.mxu0 %v182
    %459 = vmatprep.subr.mxu0 %v185
    %460 = vmatpush1.msra.mxu0 %v184
    %461 = vmatprep.subr.mxu0 %v187
    %462 = vmatpush1.msra.mxu0 %v186
    %463 = vmatprep.subr.mxu0 %v189
    %464 = vmatpush1.msra.mxu0 %v188
    %465 = vmatprep.subr.mxu0 %v191
    %466 = vmatpush1.msra.mxu0 %v190
    %467 = vmatprep.subr.mxu0 %v193
    %468 = vmatpush1.msra.mxu0 %v192
    %469 = vmatprep.subr.mxu0 %v195
    %470 = vmatpush1.msra.mxu0 %v194
    %471 = vmatprep.subr.mxu0 %v197
    %472 = vmatpush1.msra.mxu0 %v196
    %473 = vmatprep.subr.mxu0 %v199
    %474 = vmatpush1.msra.mxu0 %v198
    %475 = vmatprep.subr.mxu0 %v201
    %476 = vmatpush1.msra.mxu0 %v200
    %477 = vmatprep.subr.mxu0 %v203
    %478 = vmatpush1.msra.mxu0 %v202
    %479 = vmatprep.subr.mxu0 %v205
    %480 = vmatpush1.msra.mxu0 %v204
    %481 = vmatprep.subr.mxu0 %v207
    %482 = vmatpush1.msra.mxu0 %v206
    %483 = vmatprep.subr.mxu0 %v209
    %484 = vmatpush1.msra.mxu0 %v208
    %485 = vmatprep.subr.mxu0 %v211
    %486 = vmatpush1.msra.mxu0 %v210
    %487 = vmatprep.subr.mxu0 %v213
    %488 = vmatpush1.msra.mxu0 %v212
    %489 = vmatprep.subr.mxu0 %v215
    %490 = vmatpush1.msra.mxu0 %v214
    %491 = vmatprep.mubr.f32.mxu0 %v83
    %492 = vmatmul.mubr.f32.gmra.mrb[0].mxu0 %v82
    %v493 = vpop.f32.mrb[0].mxu0
    %v494 = vadd.f32 %v423, %v493
    %v495 = vpop.f32.mrb[0].mxu0
    %v496 = vadd.f32 %v425, %v495
    %497 = vdwg.mxu0
    %498 = vmatprep.subr.mxu0 %v217
    %499 = vmatpush1.msra.mxu0 %v216
    %500 = vmatprep.subr.mxu0 %v219
    %501 = vmatpush1.msra.mxu0 %v218
    %502 = vmatprep.subr.mxu0 %v221
    %503 = vmatpush1.msra.mxu0 %v220
    %504 = vmatprep.subr.mxu0 %v223
    %505 = vmatpush1.msra.mxu0 %v222
    %506 = vmatprep.subr.mxu0 %v225
    %507 = vmatpush1.msra.mxu0 %v224
    %508 = vmatprep.subr.mxu0 %v227
    %509 = vmatpush1.msra.mxu0 %v226
    %510 = vmatprep.subr.mxu0 %v229
    %511 = vmatpush1.msra.mxu0 %v228
    %512 = vmatprep.subr.mxu0 %v231
    %513 = vmatpush1.msra.mxu0 %v230
    %514 = vmatprep.subr.mxu0 %v233
    %515 = vmatpush1.msra.mxu0 %v232
    %516 = vmatprep.subr.mxu0 %v235
    %517 = vmatpush1.msra.mxu0 %v234
    %518 = vmatprep.subr.mxu0 %v237
    %519 = vmatpush1.msra.mxu0 %v236
    %520 = vmatprep.subr.mxu0 %v239
    %521 = vmatpush1.msra.mxu0 %v238
    %522 = vmatprep.subr.mxu0 %v241
    %523 = vmatpush1.msra.mxu0 %v240
    %524 = vmatprep.subr.mxu0 %v243
    %525 = vmatpush1.msra.mxu0 %v242
    %526 = vmatprep.subr.mxu0 %v245
    %527 = vmatpush1.msra.mxu0 %v244
    %528 = vmatprep.subr.mxu0 %v247
    %529 = vmatpush1.msra.mxu0 %v246
    %530 = vmatprep.subr.mxu0 %v249
    %531 = vmatpush1.msra.mxu0 %v248
    %532 = vmatprep.subr.mxu0 %v251
    %533 = vmatpush1.msra.mxu0 %v250
    %534 = vmatprep.subr.mxu0 %v253
    %535 = vmatpush1.msra.mxu0 %v252
    %536 = vmatprep.subr.mxu0 %v255
    %537 = vmatpush1.msra.mxu0 %v254
    %538 = vmatprep.subr.mxu0 %v257
    %539 = vmatpush1.msra.mxu0 %v256
    %540 = vmatprep.subr.mxu0 %v259
    %541 = vmatpush1.msra.mxu0 %v258
    %542 = vmatprep.subr.mxu0 %v261
    %543 = vmatpush1.msra.mxu0 %v260
    %544 = vmatprep.subr.mxu0 %v263
    %545 = vmatpush1.msra.mxu0 %v262
    %546 = vmatprep.subr.mxu0 %v265
    %547 = vmatpush1.msra.mxu0 %v264
    %548 = vmatprep.subr.mxu0 %v267
    %549 = vmatpush1.msra.mxu0 %v266
    %550 = vmatprep.subr.mxu0 %v269
    %551 = vmatpush1.msra.mxu0 %v268
    %552 = vmatprep.subr.mxu0 %v271
    %553 = vmatpush1.msra.mxu0 %v270
    %554 = vmatprep.subr.mxu0 %v273
    %555 = vmatpush1.msra.mxu0 %v272
    %556 = vmatprep.subr.mxu0 %v275
    %557 = vmatpush1.msra.mxu0 %v274
    %558 = vmatprep.subr.mxu0 %v277
    %559 = vmatpush1.msra.mxu0 %v276
    %560 = vmatprep.subr.mxu0 %v279
    %561 = vmatpush1.msra.mxu0 %v278
    %562 = vmatprep.mubr.f32.mxu0 %v85
    %563 = vmatmul.mubr.f32.gmra.mrb[0].mxu0 %v84
    %v564 = vpop.f32.mrb[0].mxu0
    %v565 = vadd.f32 %v494, %v564
    %v566 = vpop.f32.mrb[0].mxu0
    %v567 = vadd.f32 %v496, %v566
    %568 = vdwg.mxu0
    %569 = vmatprep.subr.mxu0 %v281
    %570 = vmatpush1.msra.mxu0 %v280
    %571 = vmatprep.subr.mxu0 %v283
    %572 = vmatpush1.msra.mxu0 %v282
    %573 = vmatprep.subr.mxu0 %v285
    %574 = vmatpush1.msra.mxu0 %v284
    %575 = vmatprep.subr.mxu0 %v287
    %576 = vmatpush1.msra.mxu0 %v286
    %577 = vmatprep.subr.mxu0 %v289
    %578 = vmatpush1.msra.mxu0 %v288
    %579 = vmatprep.subr.mxu0 %v291
    %580 = vmatpush1.msra.mxu0 %v290
    %581 = vmatprep.subr.mxu0 %v293
    %582 = vmatpush1.msra.mxu0 %v292
    %583 = vmatprep.subr.mxu0 %v295
    %584 = vmatpush1.msra.mxu0 %v294
    %585 = vmatprep.subr.mxu0 %v297
    %586 = vmatpush1.msra.mxu0 %v296
    %587 = vmatprep.subr.mxu0 %v299
    %588 = vmatpush1.msra.mxu0 %v298
    %589 = vmatprep.subr.mxu0 %v301
    %590 = vmatpush1.msra.mxu0 %v300
    %591 = vmatprep.subr.mxu0 %v303
    %592 = vmatpush1.msra.mxu0 %v302
    %593 = vmatprep.subr.mxu0 %v305
    %594 = vmatpush1.msra.mxu0 %v304
    %595 = vmatprep.subr.mxu0 %v307
    %596 = vmatpush1.msra.mxu0 %v306
    %597 = vmatprep.subr.mxu0 %v309
    %598 = vmatpush1.msra.mxu0 %v308
    %599 = vmatprep.subr.mxu0 %v311
    %600 = vmatpush1.msra.mxu0 %v310
    %601 = vmatprep.subr.mxu0 %v313
    %602 = vmatpush1.msra.mxu0 %v312
    %603 = vmatprep.subr.mxu0 %v315
    %604 = vmatpush1.msra.mxu0 %v314
    %605 = vmatprep.subr.mxu0 %v317
    %606 = vmatpush1.msra.mxu0 %v316
    %607 = vmatprep.subr.mxu0 %v319
    %608 = vmatpush1.msra.mxu0 %v318
    %609 = vmatprep.subr.mxu0 %v321
    %610 = vmatpush1.msra.mxu0 %v320
    %611 = vmatprep.subr.mxu0 %v323
    %612 = vmatpush1.msra.mxu0 %v322
    %613 = vmatprep.subr.mxu0 %v325
    %614 = vmatpush1.msra.mxu0 %v324
    %615 = vmatprep.subr.mxu0 %v327
    %616 = vmatpush1.msra.mxu0 %v326
    %617 = vmatprep.subr.mxu0 %v329
    %618 = vmatpush1.msra.mxu0 %v328
    %619 = vmatprep.subr.mxu0 %v331
    %620 = vmatpush1.msra.mxu0 %v330
    %621 = vmatprep.subr.mxu0 %v333
    %622 = vmatpush1.msra.mxu0 %v332
    %623 = vmatprep.subr.mxu0 %v335
    %624 = vmatpush1.msra.mxu0 %v334
    %625 = vmatprep.subr.mxu0 %v337
    %626 = vmatpush1.msra.mxu0 %v336
    %627 = vmatprep.subr.mxu0 %v339
    %628 = vmatpush1.msra.mxu0 %v338
    %629 = vmatprep.subr.mxu0 %v341
    %630 = vmatpush1.msra.mxu0 %v340
    %631 = vmatprep.subr.mxu0 %v343
    %632 = vmatpush1.msra.mxu0 %v342
    %633 = vmatprep.mubr.f32.mxu0 %v87
    %634 = vmatmul.mubr.f32.gmra.mrb[0].mxu0 %v86
    %v635 = vpop.f32.mrb[0].mxu0
    %v636 = vadd.f32 %v565, %v635
    %v637 = vpop.f32.mrb[0].mxu0
    %v638 = vadd.f32 %v567, %v637
    %639 = vdwg.mxu0
    %v640 = vld [vmem:[#allocation7] sm:$0xff]
    %v641 = vld [vmem:[#allocation7 + $0x8] sm:$0xff]
    %v642 = vld [vmem:[#allocation7 + $0x10] sm:$0xff]
    %v643 = vld [vmem:[#allocation7 + $0x18] sm:$0xff]
    %v644 = vld [vmem:[#allocation7 + $0x20] sm:$0xff]
    %v645 = vld [vmem:[#allocation7 + $0x28] sm:$0xff]
    %v646 = vld [vmem:[#allocation7 + $0x30] sm:$0xff]
    %v647 = vld [vmem:[#allocation7 + $0x38] sm:$0xff]
    %v648 = vld [vmem:[#allocation7 + $0x40] sm:$0xff]
    %v649 = vld [vmem:[#allocation7 + $0x48] sm:$0xff]
    %v650 = vld [vmem:[#allocation7 + $0x50] sm:$0xff]
    %v651 = vld [vmem:[#allocation7 + $0x58] sm:$0xff]
    %v652 = vld [vmem:[#allocation7 + $0x60] sm:$0xff]
    %v653 = vld [vmem:[#allocation7 + $0x68] sm:$0xff]
    %v654 = vld [vmem:[#allocation7 + $0x70] sm:$0xff]
    %v655 = vld [vmem:[#allocation7 + $0x78] sm:$0xff]
    %v656 = vld [vmem:[#allocation7 + $0x80] sm:$0xff]
    %v657 = vld [vmem:[#allocation7 + $0x88] sm:$0xff]
    %v658 = vld [vmem:[#allocation7 + $0x90] sm:$0xff]
    %v659 = vld [vmem:[#allocation7 + $0x98] sm:$0xff]
    %v660 = vld [vmem:[#allocation7 + $0xa0] sm:$0xff]
    %v661 = vld [vmem:[#allocation7 + $0xa8] sm:$0xff]
    %v662 = vld [vmem:[#allocation7 + $0xb0] sm:$0xff]
    %v663 = vld [vmem:[#allocation7 + $0xb8] sm:$0xff]
    %v664 = vld [vmem:[#allocation7 + $0xc0] sm:$0xff]
    %v665 = vld [vmem:[#allocation7 + $0xc8] sm:$0xff]
    %v666 = vld [vmem:[#allocation7 + $0xd0] sm:$0xff]
    %v667 = vld [vmem:[#allocation7 + $0xd8] sm:$0xff]
    %v668 = vld [vmem:[#allocation7 + $0xe0] sm:$0xff]
    %v669 = vld [vmem:[#allocation7 + $0xe8] sm:$0xff]
    %v670 = vld [vmem:[#allocation7 + $0xf0] sm:$0xff]
    %v671 = vld [vmem:[#allocation7 + $0xf8] sm:$0xff]
    %v672 = vld [vmem:[#allocation7 + $0x100] sm:$0xff]
    %v673 = vld [vmem:[#allocation7 + $0x108] sm:$0xff]
    %v674 = vld [vmem:[#allocation7 + $0x110] sm:$0xff]
    %v675 = vld [vmem:[#allocation7 + $0x118] sm:$0xff]
    %v676 = vld [vmem:[#allocation7 + $0x120] sm:$0xff]
    %v677 = vld [vmem:[#allocation7 + $0x128] sm:$0xff]
    %v678 = vld [vmem:[#allocation7 + $0x130] sm:$0xff]
    %v679 = vld [vmem:[#allocation7 + $0x138] sm:$0xff]
    %v680 = vld [vmem:[#allocation7 + $0x140] sm:$0xff]
    %v681 = vld [vmem:[#allocation7 + $0x148] sm:$0xff]
    %v682 = vld [vmem:[#allocation7 + $0x150] sm:$0xff]
    %v683 = vld [vmem:[#allocation7 + $0x158] sm:$0xff]
    %v684 = vld [vmem:[#allocation7 + $0x160] sm:$0xff]
    %v685 = vld [vmem:[#allocation7 + $0x168] sm:$0xff]
    %v686 = vld [vmem:[#allocation7 + $0x170] sm:$0xff]
    %v687 = vld [vmem:[#allocation7 + $0x178] sm:$0xff]
    %v688 = vld [vmem:[#allocation7 + $0x180] sm:$0xff]
    %v689 = vld [vmem:[#allocation7 + $0x188] sm:$0xff]
    %v690 = vld [vmem:[#allocation7 + $0x190] sm:$0xff]
    %v691 = vld [vmem:[#allocation7 + $0x198] sm:$0xff]
    %v692 = vld [vmem:[#allocation7 + $0x1a0] sm:$0xff]
    %v693 = vld [vmem:[#allocation7 + $0x1a8] sm:$0xff]
    %v694 = vld [vmem:[#allocation7 + $0x1b0] sm:$0xff]
    %v695 = vld [vmem:[#allocation7 + $0x1b8] sm:$0xff]
    %v696 = vld [vmem:[#allocation7 + $0x1c0] sm:$0xff]
    %v697 = vld [vmem:[#allocation7 + $0x1c8] sm:$0xff]
    %v698 = vld [vmem:[#allocation7 + $0x1d0] sm:$0xff]
    %v699 = vld [vmem:[#allocation7 + $0x1d8] sm:$0xff]
    %v700 = vld [vmem:[#allocation7 + $0x1e0] sm:$0xff]
    %v701 = vld [vmem:[#allocation7 + $0x1e8] sm:$0xff]
    %v702 = vld [vmem:[#allocation7 + $0x1f0] sm:$0xff]
    %v703 = vld [vmem:[#allocation7 + $0x1f8] sm:$0xff]
    %v704 = vld [vmem:[%s4] sm:$0x3]
    %v706 = vlaneseq
    %v707 = vshrl.u32 %v706, 7
    %v708 = vsub.s32 0, %v707
    %v709 = vrot.slane %v704, %v708
    %v710 = vlaneseq
    %v711 = vshrl.u32 %v710, 7
    %v712 = vsub.s32 1, %v711
    %v713 = vrot.slane %v704, %v712
    %716 = vmatprep.subr.mxu0 %v641
    %717 = vmatpush1.msra.mxu0 %v640
    %718 = vmatprep.subr.mxu0 %v643
    %719 = vmatpush1.msra.mxu0 %v642
    %720 = vmatprep.subr.mxu0 %v645
    %721 = vmatpush1.msra.mxu0 %v644
    %722 = vmatprep.subr.mxu0 %v647
    %723 = vmatpush1.msra.mxu0 %v646
    %724 = vmatprep.subr.mxu0 %v649
    %725 = vmatpush1.msra.mxu0 %v648
    %726 = vmatprep.subr.mxu0 %v651
    %727 = vmatpush1.msra.mxu0 %v650
    %728 = vmatprep.subr.mxu0 %v653
    %729 = vmatpush1.msra.mxu0 %v652
    %730 = vmatprep.subr.mxu0 %v655
    %731 = vmatpush1.msra.mxu0 %v654
    %732 = vmatprep.subr.mxu0 %v657
    %733 = vmatpush1.msra.mxu0 %v656
    %734 = vmatprep.subr.mxu0 %v659
    %735 = vmatpush1.msra.mxu0 %v658
    %736 = vmatprep.subr.mxu0 %v661
    %737 = vmatpush1.msra.mxu0 %v660
    %738 = vmatprep.subr.mxu0 %v663
    %739 = vmatpush1.msra.mxu0 %v662
    %740 = vmatprep.subr.mxu0 %v665
    %741 = vmatpush1.msra.mxu0 %v664
    %742 = vmatprep.subr.mxu0 %v667
    %743 = vmatpush1.msra.mxu0 %v666
    %744 = vmatprep.subr.mxu0 %v669
    %745 = vmatpush1.msra.mxu0 %v668
    %746 = vmatprep.subr.mxu0 %v671
    %747 = vmatpush1.msra.mxu0 %v670
    %748 = vmatprep.subr.mxu0 %v673
    %749 = vmatpush1.msra.mxu0 %v672
    %750 = vmatprep.subr.mxu0 %v675
    %751 = vmatpush1.msra.mxu0 %v674
    %752 = vmatprep.subr.mxu0 %v677
    %753 = vmatpush1.msra.mxu0 %v676
    %754 = vmatprep.subr.mxu0 %v679
    %755 = vmatpush1.msra.mxu0 %v678
    %756 = vmatprep.subr.mxu0 %v681
    %757 = vmatpush1.msra.mxu0 %v680
    %758 = vmatprep.subr.mxu0 %v683
    %759 = vmatpush1.msra.mxu0 %v682
    %760 = vmatprep.subr.mxu0 %v685
    %761 = vmatpush1.msra.mxu0 %v684
    %762 = vmatprep.subr.mxu0 %v687
    %763 = vmatpush1.msra.mxu0 %v686
    %764 = vmatprep.subr.mxu0 %v689
    %765 = vmatpush1.msra.mxu0 %v688
    %766 = vmatprep.subr.mxu0 %v691
    %767 = vmatpush1.msra.mxu0 %v690
    %768 = vmatprep.subr.mxu0 %v693
    %769 = vmatpush1.msra.mxu0 %v692
    %770 = vmatprep.subr.mxu0 %v695
    %771 = vmatpush1.msra.mxu0 %v694
    %772 = vmatprep.subr.mxu0 %v697
    %773 = vmatpush1.msra.mxu0 %v696
    %774 = vmatprep.subr.mxu0 %v699
    %775 = vmatpush1.msra.mxu0 %v698
    %776 = vmatprep.subr.mxu0 %v701
    %777 = vmatpush1.msra.mxu0 %v700
    %778 = vmatprep.subr.mxu0 %v703
    %779 = vmatpush1.msra.mxu0 %v702
    %780 = vmatprep.mubr.f32.mxu0 %v638
    %781 = vmatmul.mubr.f32.gmra.mrb[0].mxu0 %v636
    %v782 = vpop.f32.mrb[0].mxu0
    %v783 = vadd.f32 %v709, %v782
    %v784 = vpop.f32.mrb[0].mxu0
    %v785 = vadd.f32 %v713, %v784
    %786 = vdwg.mxu0
    %v787 = vld [vmem:[#allocation8] sm:$0xff]
    %v788 = vld [vmem:[#allocation8 + $0x8] sm:$0xff]
    %v789 = vld [vmem:[#allocation8 + $0x10] sm:$0xff]
    %v790 = vld [vmem:[#allocation8 + $0x18] sm:$0xff]
    %v791 = vld [vmem:[#allocation8 + $0x20] sm:$0xff]
    %v792 = vld [vmem:[#allocation8 + $0x28] sm:$0xff]
    %v793 = vld [vmem:[#allocation8 + $0x30] sm:$0xff]
    %v794 = vld [vmem:[#allocation8 + $0x38] sm:$0xff]
    %v795 = vld [vmem:[#allocation8 + $0x40] sm:$0xff]
    %v796 = vld [vmem:[#allocation8 + $0x48] sm:$0xff]
    %v797 = vld [vmem:[#allocation8 + $0x50] sm:$0xff]
    %v798 = vld [vmem:[#allocation8 + $0x58] sm:$0xff]
    %v799 = vld [vmem:[#allocation8 + $0x60] sm:$0xff]
    %v800 = vld [vmem:[#allocation8 + $0x68] sm:$0xff]
    %v801 = vld [vmem:[#allocation8 + $0x70] sm:$0xff]
    %v802 = vld [vmem:[#allocation8 + $0x78] sm:$0xff]
    %v803 = vld [vmem:[#allocation8 + $0x80] sm:$0xff]
    %v804 = vld [vmem:[#allocation8 + $0x88] sm:$0xff]
    %v805 = vld [vmem:[#allocation8 + $0x90] sm:$0xff]
    %v806 = vld [vmem:[#allocation8 + $0x98] sm:$0xff]
    %v807 = vld [vmem:[#allocation8 + $0xa0] sm:$0xff]
    %v808 = vld [vmem:[#allocation8 + $0xa8] sm:$0xff]
    %v809 = vld [vmem:[#allocation8 + $0xb0] sm:$0xff]
    %v810 = vld [vmem:[#allocation8 + $0xb8] sm:$0xff]
    %v811 = vld [vmem:[#allocation8 + $0xc0] sm:$0xff]
    %v812 = vld [vmem:[#allocation8 + $0xc8] sm:$0xff]
    %v813 = vld [vmem:[#allocation8 + $0xd0] sm:$0xff]
    %v814 = vld [vmem:[#allocation8 + $0xd8] sm:$0xff]
    %v815 = vld [vmem:[#allocation8 + $0xe0] sm:$0xff]
    %v816 = vld [vmem:[#allocation8 + $0xe8] sm:$0xff]
    %v817 = vld [vmem:[#allocation8 + $0xf0] sm:$0xff]
    %v818 = vld [vmem:[#allocation8 + $0xf8] sm:$0xff]
    %v819 = vld [vmem:[%s6] sm:$0x1]
    %v821 = vlaneseq
    %v822 = vshrl.u32 %v821, 7
    %v823 = vsub.s32 0, %v822
    %v824 = vrot.slane %v819, %v823
    %826 = vmatprep.subr.mxu0 0.0
    %827 = vmatpush1.msra.mxu0 %v787
    %828 = vmatprep.subr.mxu0 0.0
    %829 = vmatpush1.msra.mxu0 %v788
    %830 = vmatprep.subr.mxu0 0.0
    %831 = vmatpush1.msra.mxu0 %v789
    %832 = vmatprep.subr.mxu0 0.0
    %833 = vmatpush1.msra.mxu0 %v790
    %834 = vmatprep.subr.mxu0 0.0
    %835 = vmatpush1.msra.mxu0 %v791
    %836 = vmatprep.subr.mxu0 0.0
    %837 = vmatpush1.msra.mxu0 %v792
    %838 = vmatprep.subr.mxu0 0.0
    %839 = vmatpush1.msra.mxu0 %v793
    %840 = vmatprep.subr.mxu0 0.0
    %841 = vmatpush1.msra.mxu0 %v794
    %842 = vmatprep.subr.mxu0 0.0
    %843 = vmatpush1.msra.mxu0 %v795
    %844 = vmatprep.subr.mxu0 0.0
    %845 = vmatpush1.msra.mxu0 %v796
    %846 = vmatprep.subr.mxu0 0.0
    %847 = vmatpush1.msra.mxu0 %v797
    %848 = vmatprep.subr.mxu0 0.0
    %849 = vmatpush1.msra.mxu0 %v798
    %850 = vmatprep.subr.mxu0 0.0
    %851 = vmatpush1.msra.mxu0 %v799
    %852 = vmatprep.subr.mxu0 0.0
    %853 = vmatpush1.msra.mxu0 %v800
    %854 = vmatprep.subr.mxu0 0.0
    %855 = vmatpush1.msra.mxu0 %v801
    %856 = vmatprep.subr.mxu0 0.0
    %857 = vmatpush1.msra.mxu0 %v802
    %858 = vmatprep.subr.mxu0 0.0
    %859 = vmatpush1.msra.mxu0 %v803
    %860 = vmatprep.subr.mxu0 0.0
    %861 = vmatpush1.msra.mxu0 %v804
    %862 = vmatprep.subr.mxu0 0.0
    %863 = vmatpush1.msra.mxu0 %v805
    %864 = vmatprep.subr.mxu0 0.0
    %865 = vmatpush1.msra.mxu0 %v806
    %866 = vmatprep.subr.mxu0 0.0
    %867 = vmatpush1.msra.mxu0 %v807
    %868 = vmatprep.subr.mxu0 0.0
    %869 = vmatpush1.msra.mxu0 %v808
    %870 = vmatprep.subr.mxu0 0.0
    %871 = vmatpush1.msra.mxu0 %v809
    %872 = vmatprep.subr.mxu0 0.0
    %873 = vmatpush1.msra.mxu0 %v810
    %874 = vmatprep.subr.mxu0 0.0
    %875 = vmatpush1.msra.mxu0 %v811
    %876 = vmatprep.subr.mxu0 0.0
    %877 = vmatpush1.msra.mxu0 %v812
    %878 = vmatprep.subr.mxu0 0.0
    %879 = vmatpush1.msra.mxu0 %v813
    %880 = vmatprep.subr.mxu0 0.0
    %881 = vmatpush1.msra.mxu0 %v814
    %882 = vmatprep.subr.mxu0 0.0
    %883 = vmatpush1.msra.mxu0 %v815
    %884 = vmatprep.subr.mxu0 0.0
    %885 = vmatpush1.msra.mxu0 %v816
    %886 = vmatprep.subr.mxu0 0.0
    %887 = vmatpush1.msra.mxu0 %v817
    %888 = vmatprep.subr.mxu0 0.0
    %889 = vmatpush1.msra.mxu0 %v818
    %890 = vmatprep.mubr.f32.mxu0 %v785
    %891 = vmatmul.mubr.f32.gmra.mrb[0].mxu0 %v783
    %v892 = vpop.f32.mrb[0].mxu0
    %v893 = vadd.f32 %v824, %v892
    %v894 = vpop.f32.mrb[0].mxu0
    %895 = vdwg.mxu0
    %896 = vst [vmem:[#allocation10] sm:$0xff] %v893
    // Predicated region
    $region46: #{tpu_custom_call.1} parent=1 // pred_check
      _
    $region47: #{tpu_custom_call.1} parent=1 // pred_check_branch
      %898 = sbr.rel (0) target = $region49
    $region48: #{tpu_custom_call.1} parent=1 // pred_region
      %s900 = ssub.s32 128, 128
      %901 = vsyncadd [#allocation4], %s900
      %s903 = sshll.u32 [#allocation10], 4
      %s904 = int_to_ptr.vmem [resolvable:$true] %s903
      %906 = dma.vmem_to_hbm [thread:$0]  %s904, 128, %s7, [#allocation4]
    $region49: #{tpu_custom_call.1} parent=1 // pred_fallthru
      _
    // Predicated region
    $region50: #{tpu_custom_call.1} parent=1 // pred_check
      _
    $region51: #{tpu_custom_call.1} parent=1 // pred_check_branch
      %908 = sbr.rel (0) target = $region53
    $region52: #{tpu_custom_call.1} parent=1 // pred_region
      %909 = dma.done [#allocation4], 128
    $region53: #{tpu_custom_call.1} parent=1 // pred_fallthru
      _
    %910 = vsyncpa [#allocation3], 1
    %911 = vsyncpa [#allocation6], 1
    %912 = vsyncpa [#allocation9], 1
    %913 = vsyncpa [#allocation4], 1

</llo_original>
